<compile_context>
chip_gen: v5e
topology: v5e:2x2
jax: 0.10.0
libtpu: 0.0.40
codegen_flags: <defaults>
</compile_context>

<pallas_src>
import functools

import jax
import jax.numpy as jnp
from jax.experimental import pallas as pl
from jax.experimental.pallas import tpu as pltpu

IN_FEATURES = 64
OUT_FEATURES = 32
BN_EPS = 1e-5
LEAKY_SLOPE = 0.01


def _cdiv(a, b):
    return -(-a // b)


try:  # generation-aware VMEM capacity (v5e/v6e: 128 MiB, v7x: 64 MiB)
    _VMEM_CAP_BYTES = int(pltpu.get_tpu_info().vmem_capacity_bytes)
except Exception:  # pragma: no cover - conservative (v7x-sized) fallback
    _VMEM_CAP_BYTES = 64 * 1024 * 1024


# ---------------------------------------------------------------------------
# Resident-y single-pass kernel (preferred path).
# ---------------------------------------------------------------------------
def _make_resident_kernel(n_rows, n_packed, lane, tile_p, num_tiles):
    nfull = n_packed // tile_p
    tail = n_packed - nfull * tile_p
    ragged = tail > 0
    aligned = (tile_p % 8) == 0
    inv_n = 1.0 / float(n_rows)

    def kernel(x_ref, w_ref, f_ref, g_ref, b_ref, o_ref, sum_ref, ssq_ref):
        i = pl.program_id(0)

        @pl.when(i == 0)
        def _init():
            sum_ref[...] = jnp.zeros_like(sum_ref)
            ssq_ref[...] = jnp.zeros_like(ssq_ref)

        def row_start(step):
            s = step * tile_p
            return pl.multiple_of(s, tile_p) if aligned else s

        def compute_tile(n_valid):
            x = x_ref[...] if n_valid == tile_p else x_ref[:n_valid, :]
            y = jnp.dot(x, w_ref[...], preferred_element_type=jnp.float32)
            o_ref[pl.ds(row_start(i), n_valid), :] = y
            if n_valid % 8 == 0:
                # Group rows by 8 so the reduction is plain vreg adds (VPU), not XLU.
                sum_ref[...] += jnp.sum(y.reshape(n_valid // 8, 8, lane), axis=0)
                ssq_ref[...] += jnp.sum((y * y).reshape(n_valid // 8, 8, lane), axis=0)
            else:
                sum_ref[0:1, :] += jnp.sum(y, axis=0, keepdims=True)
                ssq_ref[0:1, :] += jnp.sum(y * y, axis=0, keepdims=True)

        if ragged:
            @pl.when(i < num_tiles - 1)
            def _full_tile():
                compute_tile(tile_p)

            @pl.when(i == num_tiles - 1)
            def _last_tile():
                compute_tile(tail)
        else:
            compute_tile(tile_p)

        @pl.when(i == num_tiles - 1)
        def _finalize():
            # Fold the `pack` interleaved lane groups into full per-feature totals
            # (broadcast across groups) with one small MXU matmul.
            s8 = jnp.dot(sum_ref[...], f_ref[...], preferred_element_type=jnp.float32)
            q8 = jnp.dot(ssq_ref[...], f_ref[...], preferred_element_type=jnp.float32)
            s_tot = jnp.sum(s8, axis=0, keepdims=True)
            q_tot = jnp.sum(q8, axis=0, keepdims=True)
            mean = s_tot * inv_n
            var = jnp.maximum(q_tot * inv_n - mean * mean, 0.0)
            scale = g_ref[...] * jax.lax.rsqrt(var + BN_EPS)
            shift = b_ref[...] - scale * mean

            def apply_chunk(start, nrows):
                z = o_ref[pl.ds(start, nrows), :] * scale + shift
                o_ref[pl.ds(start, nrows), :] = jnp.where(z >= 0.0, z, LEAKY_SLOPE * z)

            if nfull > 0:
                @pl.loop(0, nfull)
                def _apply(t):
                    apply_chunk(row_start(t), tile_p)
            if ragged:
                apply_chunk(nfull * tile_p, tail)

    return kernel


def _resident_path(x_p, w_bd, fold, gamma_l, beta_l, n_rows, tile_p, vmem_limit):
    n_packed, in_lane = x_p.shape
    lane = w_bd.shape[1]
    num_tiles = _cdiv(n_packed, tile_p)

    full = lambda shape: pl.BlockSpec(shape, lambda i: (0, 0))
    x_spec = pl.BlockSpec((tile_p, in_lane), lambda i: (i, 0))

    return pl.pallas_call(
        _make_resident_kernel(n_rows, n_packed, lane, tile_p, num_tiles),
        out_shape=jax.ShapeDtypeStruct((n_packed, lane), jnp.float32),
        grid=(num_tiles,),
        in_specs=[x_spec, full(w_bd.shape), full(fold.shape),
                  full((1, lane)), full((1, lane))],
        out_specs=full((n_packed, lane)),          # resident accumulator block
        scratch_shapes=[pltpu.VMEM((8, lane), jnp.float32),
                        pltpu.VMEM((8, lane), jnp.float32)],
        compiler_params=pltpu.CompilerParams(
            dimension_semantics=("arbitrary",),
            vmem_limit_bytes=vmem_limit,
        ),
    )(x_p, w_bd, fold, gamma_l, beta_l)


# ---------------------------------------------------------------------------
# Recompute two-pass fallback (batch too large to keep y resident in VMEM).
# ---------------------------------------------------------------------------
def _make_stats_kernel(lane, tile_p, num_tiles, n_packed):
    nfull = n_packed // tile_p
    tail = n_packed - nfull * tile_p
    ragged = tail > 0

    def kernel(x_ref, w_ref, sum_ref, ssq_ref):
        i = pl.program_id(0)

        @pl.when(i == 0)
        def _init():
            sum_ref[...] = jnp.zeros_like(sum_ref)
            ssq_ref[...] = jnp.zeros_like(ssq_ref)

        def accumulate(n_valid):
            x = x_ref[...] if n_valid == tile_p else x_ref[:n_valid, :]
            y = jnp.dot(x, w_ref[...], preferred_element_type=jnp.float32)
            if n_valid % 8 == 0:
                sum_ref[...] += jnp.sum(y.reshape(n_valid // 8, 8, lane), axis=0)
                ssq_ref[...] += jnp.sum((y * y).reshape(n_valid // 8, 8, lane), axis=0)
            else:
                sum_ref[0:1, :] += jnp.sum(y, axis=0, keepdims=True)
                ssq_ref[0:1, :] += jnp.sum(y * y, axis=0, keepdims=True)

        if ragged:
            @pl.when(i < num_tiles - 1)
            def _full_tile():
                accumulate(tile_p)

            @pl.when(i == num_tiles - 1)
            def _last_tile():
                accumulate(tail)
        else:
            accumulate(tile_p)

    return kernel


def _apply_kernel(x_ref, w_ref, scale_ref, shift_ref, o_ref):
    y = jnp.dot(x_ref[...], w_ref[...], preferred_element_type=jnp.float32)
    z = y * scale_ref[...] + shift_ref[...]
    o_ref[...] = jnp.where(z >= 0.0, z, LEAKY_SLOPE * z)


def _two_pass_path(x_p, w_bd, gamma, beta, n_rows, pack, tile_p, vmem_limit):
    n_packed, in_lane = x_p.shape
    lane = w_bd.shape[1]
    num_tiles = _cdiv(n_packed, tile_p)

    full = lambda shape: pl.BlockSpec(shape, lambda i: (0, 0))
    x_spec = pl.BlockSpec((tile_p, in_lane), lambda i: (i, 0))

    # Pass 1: batch statistics only (y is recomputed in pass 2 instead of spilled to HBM).
    s8, q8 = pl.pallas_call(
        _make_stats_kernel(lane, tile_p, num_tiles, n_packed),
        out_shape=(jax.ShapeDtypeStruct((8, lane), jnp.float32),
                   jax.ShapeDtypeStruct((8, lane), jnp.float32)),
        grid=(num_tiles,),
        in_specs=[x_spec, full(w_bd.shape)],
        out_specs=(full((8, lane)), full((8, lane))),
        compiler_params=pltpu.CompilerParams(
            dimension_semantics=("arbitrary",), vmem_limit_bytes=vmem_limit),
    )(x_p, w_bd)

    inv_n = 1.0 / float(n_rows)
    s = s8.sum(axis=0).reshape(pack, OUT_FEATURES).sum(axis=0)
    q = q8.sum(axis=0).reshape(pack, OUT_FEATURES).sum(axis=0)
    mean = s * inv_n
    var = jnp.maximum(q * inv_n - mean * mean, 0.0)
    scale32 = gamma.reshape(-1) * jax.lax.rsqrt(var + BN_EPS)
    shift32 = beta.reshape(-1) - scale32 * mean
    scale_l = jnp.tile(scale32, pack).reshape(1, lane)
    shift_l = jnp.tile(shift32, pack).reshape(1, lane)

    # Pass 2: recompute matmul + fused BN/LeakyReLU, megacore-shardable.
    return pl.pallas_call(
        _apply_kernel,
        out_shape=jax.ShapeDtypeStruct((n_packed, lane), jnp.float32),
        grid=(num_tiles,),
        in_specs=[x_spec, full(w_bd.shape), full((1, lane)), full((1, lane))],
        out_specs=pl.BlockSpec((tile_p, lane), lambda i: (i, 0)),
        compiler_params=pltpu.CompilerParams(
            dimension_semantics=("parallel",), vmem_limit_bytes=vmem_limit),
    )(x_p, w_bd, scale_l, shift_l)


# ---------------------------------------------------------------------------
# Public forward.
# ---------------------------------------------------------------------------
@functools.partial(jax.jit, static_argnames=("tile_rows", "max_resident_rows"))
def dsfe_forward(x, w, b, gamma, beta, *, tile_rows=8192, max_resident_rows=None):
    # Training-mode BatchNorm subtracts the batch mean, which cancels the linear
    # bias exactly, so `b` is accepted for interface parity but never used.
    del b
    n = x.shape[0]
    assert x.shape[1] == IN_FEATURES
    x = x.astype(jnp.float32)
    w = w.reshape(IN_FEATURES, OUT_FEATURES).astype(jnp.float32)
    gamma = gamma.reshape(1, OUT_FEATURES).astype(jnp.float32)
    beta = beta.reshape(1, OUT_FEATURES).astype(jnp.float32)

    # Lane densification: pack consecutive rows so output tiles are up to 128 lanes wide.
    pack = 4 if n % 4 == 0 else (2 if n % 2 == 0 else 1)
    lane = OUT_FEATURES * pack
    in_lane = IN_FEATURES * pack
    n_packed = n // pack
    x_p = x.reshape(n_packed, in_lane)                       # free row-major reshape
    w_bd = jnp.kron(jnp.eye(pack, dtype=jnp.float32), w)     # block-diagonal weight
    gamma_l = jnp.tile(gamma, (1, pack))
    beta_l = jnp.tile(beta, (1, pack))

    # Row tile (packed rows): multiple of 8 unless a single tile covers everything.
    tile_p = max(8, (tile_rows // pack) // 8 * 8)
    if n_packed <= tile_p:
        tile_p = n_packed

    # Generation-aware resident-y budget.
    x_tile_bytes = tile_p * in_lane * 4
    resident_bytes = n_packed * lane * 4
    budget = (_VMEM_CAP_BYTES * 3) // 4 - (2 * x_tile_bytes + (8 << 20))
    use_resident = resident_bytes <= max(budget, 0)
    if max_resident_rows is not None:
        use_resident = use_resident and (n <= max_resident_rows)

    if use_resident:
        vmem_limit = min(int(_VMEM_CAP_BYTES * 0.9),
                         resident_bytes + 2 * x_tile_bytes + (24 << 20))
        feat = jnp.arange(lane, dtype=jnp.int32) % OUT_FEATURES
        fold = (feat[None, :] == feat[:, None]).astype(jnp.float32)   # group-sum matrix
        out_p = _resident_path(x_p, w_bd, fold, gamma_l, beta_l, n, tile_p, vmem_limit)
    else:
        vmem_limit = min(int(_VMEM_CAP_BYTES * 0.9),
                         2 * x_tile_bytes + 2 * tile_p * lane * 4 + (24 << 20))
        out_p = _two_pass_path(x_p, w_bd, gamma, beta, n, pack, tile_p, vmem_limit)

    return out_p.reshape(n, OUT_FEATURES)


# ---------------------------------------------------------------------------
# Reference / test harness.
# ---------------------------------------------------------------------------
def init_params(key):
    kw, kb, kg, kbe = jax.random.split(key, 4)
    bound = 1.0 / jnp.sqrt(IN_FEATURES)
    w = jax.random.uniform(kw, (IN_FEATURES, OUT_FEATURES), jnp.float32, -bound, bound)
    b = jax.random.uniform(kb, (1, OUT_FEATURES), jnp.float32, -bound, bound)
    gamma = 1.0 + 0.1 * jax.random.normal(kg, (1, OUT_FEATURES), jnp.float32)
    beta = 0.1 * jax.random.normal(kbe, (1, OUT_FEATURES), jnp.float32)
    return w, b, gamma, beta


def reference_forward(x, w, b, gamma, beta):
    # Full PyTorch-equivalent forward, *including* the linear bias, to verify the
    # bias-cancellation argument numerically.
    y = x @ w + b
    mean = jnp.mean(y, axis=0, keepdims=True)
    var = jnp.mean((y - mean) ** 2, axis=0, keepdims=True)
    z = gamma * (y - mean) / jnp.sqrt(var + BN_EPS) + beta
    return jnp.where(z >= 0.0, z, LEAKY_SLOPE * z)


if __name__ == "__main__":
    key = jax.random.PRNGKey(0)
    kx, kp = jax.random.split(key)
    w, b, gamma, beta = init_params(kp)

    # (batch, tile_rows, max_resident_rows): single-tile resident (pack=4),
    # multi-tile ragged resident, forced two-pass fallback, pack=1 and pack=2 layouts.
    cases = [
        (8, 8192, None),
        (200, 64, None),
        (200, 64, 16),
        (9, 8192, None),
        (10, 8192, None),
    ]
    for n, tile_rows, max_res in cases:
        kx, sub = jax.random.split(kx)
        x = jax.random.normal(sub, (n, IN_FEATURES), jnp.float32)
        out = jax.block_until_ready(
            dsfe_forward(x, w, b, gamma, beta,
                         tile_rows=tile_rows, max_resident_rows=max_res))
        ref = reference_forward(x, w, b, gamma, beta)
        assert out.shape == (n, OUT_FEATURES)
        assert jnp.allclose(out, ref, atol=2e-4, rtol=2e-4), f"mismatch at n={n}"

    print("KERNEL_OK")
</pallas_src>

<mosaic_0001>
module attributes {stable_mosaic.version = 11 : i64} {
  func.func @kernel(%arg0: i32, %arg1: memref<2x256xf32, #tpu.memory_space<vmem>>, %arg2: memref<256x128xf32, #tpu.memory_space<vmem>>, %arg3: memref<128x128xf32, #tpu.memory_space<vmem>>, %arg4: memref<1x128xf32, #tpu.memory_space<vmem>>, %arg5: memref<1x128xf32, #tpu.memory_space<vmem>>, %arg6: memref<2x128xf32, #tpu.memory_space<vmem>>, %arg7: memref<8x128xf32, #tpu.memory_space<vmem>>, %arg8: memref<8x128xf32, #tpu.memory_space<vmem>>) attributes {dimension_semantics = [#tpu.dimension_semantics<arbitrary>], iteration_bounds = array<i64: 1>, scalar_prefetch = 0 : i64, scratch_operands = 2 : i64, tpu.core_type = #tpu.core_type<tc>, window_params = [{transform_indices = @transform_0, window_bounds = array<i64: 2, 256>}, {pipeline_mode = #tpu.pipeline_mode<synchronous>, transform_indices = @transform_1, window_bounds = array<i64: 256, 128>}, {pipeline_mode = #tpu.pipeline_mode<synchronous>, transform_indices = @transform_2, window_bounds = array<i64: 128, 128>}, {pipeline_mode = #tpu.pipeline_mode<synchronous>, transform_indices = @transform_3, window_bounds = array<i64: 1, 128>}, {pipeline_mode = #tpu.pipeline_mode<synchronous>, transform_indices = @transform_4, window_bounds = array<i64: 1, 128>}, {pipeline_mode = #tpu.pipeline_mode<synchronous>, transform_indices = @transform_5, window_bounds = array<i64: 2, 128>}]} {
    %c0_i32 = arith.constant 0 : i32
    %0 = arith.cmpi eq, %arg0, %c0_i32 : i32
    %1 = arith.extui %0 : i1 to i32
    %c0_i32_0 = arith.constant 0 : i32
    %2 = arith.cmpi ne, %1, %c0_i32_0 : i32
    scf.if %2 {
      %cst_17 = arith.constant 0.000000e+00 : f32
      %23 = vector.broadcast %cst_17 : f32 to vector<8x128xf32>
      %c0_18 = arith.constant 0 : index
      %c0_19 = arith.constant 0 : index
      %24 = vector.load %arg7[%c0_18, %c0_19] : memref<8x128xf32, #tpu.memory_space<vmem>>, vector<8x128xf32>
      tpu.vector_store %arg7[%c0_18, %c0_19], %23 {strides = array<i32>} : memref<8x128xf32, #tpu.memory_space<vmem>>, vector<8x128xf32>,
      %cst_20 = arith.constant 0.000000e+00 : f32
      %25 = vector.broadcast %cst_20 : f32 to vector<8x128xf32>
      %c0_21 = arith.constant 0 : index
      %c0_22 = arith.constant 0 : index
      %26 = vector.load %arg8[%c0_21, %c0_22] : memref<8x128xf32, #tpu.memory_space<vmem>>, vector<8x128xf32>
      tpu.vector_store %arg8[%c0_21, %c0_22], %25 {strides = array<i32>} : memref<8x128xf32, #tpu.memory_space<vmem>>, vector<8x128xf32>,
    } else {
    }
    %c0 = arith.constant 0 : index
    %c0_1 = arith.constant 0 : index
    %3 = vector.load %arg1[%c0, %c0_1] : memref<2x256xf32, #tpu.memory_space<vmem>>, vector<2x256xf32>
    %c0_2 = arith.constant 0 : index
    %c0_3 = arith.constant 0 : index
    %4 = vector.load %arg2[%c0_2, %c0_3] : memref<256x128xf32, #tpu.memory_space<vmem>>, vector<256x128xf32>
    %cst = arith.constant dense<0.000000e+00> : vector<2x128xf32>
    %5 = tpu.matmul %3, %4, %cst {dimension_numbers = #tpu.dot_dimension_numbers<[1], [0], [0], [1], [0, 0, 1, 1], [], []>} : vector<2x256xf32>, vector<256x128xf32>, vector<2x128xf32> -> vector<2x128xf32>
    %c2_i32 = arith.constant 2 : i32
    %6 = arith.muli %arg0, %c2_i32 : i32
    %7 = arith.index_cast %6 : i32 to index
    %c0_4 = arith.constant 0 : index
    %8 = vector.load %arg6[%7, %c0_4] : memref<2x128xf32, #tpu.memory_space<vmem>>, vector<2x128xf32>
    tpu.vector_store %arg6[%7, %c0_4], %5 {strides = array<i32>} : memref<2x128xf32, #tpu.memory_space<vmem>>, vector<2x128xf32>,
    %c0_5 = arith.constant 0 : index
    %c0_6 = arith.constant 0 : index
    %9 = vector.load %arg7[%c0_5, %c0_6] : memref<8x128xf32, #tpu.memory_space<vmem>>, vector<1x128xf32>
    %cst_7 = arith.constant dense<0.000000e+00> : vector<128xf32>
    %10 = vector.multi_reduction <add>, %5, %cst_7 [0] : vector<2x128xf32> to vector<128xf32>
    %11 = vector.shape_cast %10 : vector<128xf32> to vector<1x128xf32>
    %12 = arith.addf %9, %11 : vector<1x128xf32>
    %c0_8 = arith.constant 0 : index
    %c0_9 = arith.constant 0 : index
    %13 = vector.load %arg7[%c0_8, %c0_9] : memref<8x128xf32, #tpu.memory_space<vmem>>, vector<1x128xf32>
    tpu.vector_store %arg7[%c0_8, %c0_9], %12 {strides = array<i32>} : memref<8x128xf32, #tpu.memory_space<vmem>>, vector<1x128xf32>,
    %c0_10 = arith.constant 0 : index
    %c0_11 = arith.constant 0 : index
    %14 = vector.load %arg8[%c0_10, %c0_11] : memref<8x128xf32, #tpu.memory_space<vmem>>, vector<1x128xf32>
    %15 = arith.mulf %5, %5 : vector<2x128xf32>
    %cst_12 = arith.constant dense<0.000000e+00> : vector<128xf32>
    %16 = vector.multi_reduction <add>, %15, %cst_12 [0] : vector<2x128xf32> to vector<128xf32>
    %17 = vector.shape_cast %16 : vector<128xf32> to vector<1x128xf32>
    %18 = arith.addf %14, %17 : vector<1x128xf32>
    %c0_13 = arith.constant 0 : index
    %c0_14 = arith.constant 0 : index
    %19 = vector.load %arg8[%c0_13, %c0_14] : memref<8x128xf32, #tpu.memory_space<vmem>>, vector<1x128xf32>
    tpu.vector_store %arg8[%c0_13, %c0_14], %18 {strides = array<i32>} : memref<8x128xf32, #tpu.memory_space<vmem>>, vector<1x128xf32>,
    %c0_i32_15 = arith.constant 0 : i32
    %20 = arith.cmpi eq, %arg0, %c0_i32_15 : i32
    %21 = arith.extui %20 : i1 to i32
    %c0_i32_16 = arith.constant 0 : i32
    %22 = arith.cmpi ne, %21, %c0_i32_16 : i32
    scf.if %22 {
      %c0_17 = arith.constant 0 : index
      %c0_18 = arith.constant 0 : index
      %23 = vector.load %arg7[%c0_17, %c0_18] : memref<8x128xf32, #tpu.memory_space<vmem>>, vector<8x128xf32>
      %c0_19 = arith.constant 0 : index
      %c0_20 = arith.constant 0 : index
      %24 = vector.load %arg3[%c0_19, %c0_20] : memref<128x128xf32, #tpu.memory_space<vmem>>, vector<128x128xf32>
      %cst_21 = arith.constant dense<0.000000e+00> : vector<8x128xf32>
      %25 = tpu.matmul %23, %24, %cst_21 {dimension_numbers = #tpu.dot_dimension_numbers<[1], [0], [0], [1], [0, 0, 1, 1], [], []>} : vector<8x128xf32>, vector<128x128xf32>, vector<8x128xf32> -> vector<8x128xf32>
      %c0_22 = arith.constant 0 : index
      %c0_23 = arith.constant 0 : index
      %26 = vector.load %arg8[%c0_22, %c0_23] : memref<8x128xf32, #tpu.memory_space<vmem>>, vector<8x128xf32>
      %c0_24 = arith.constant 0 : index
      %c0_25 = arith.constant 0 : index
      %27 = vector.load %arg3[%c0_24, %c0_25] : memref<128x128xf32, #tpu.memory_space<vmem>>, vector<128x128xf32>
      %cst_26 = arith.constant dense<0.000000e+00> : vector<8x128xf32>
      %28 = tpu.matmul %26, %27, %cst_26 {dimension_numbers = #tpu.dot_dimension_numbers<[1], [0], [0], [1], [0, 0, 1, 1], [], []>} : vector<8x128xf32>, vector<128x128xf32>, vector<8x128xf32> -> vector<8x128xf32>
      %cst_27 = arith.constant dense<0.000000e+00> : vector<128xf32>
      %29 = vector.multi_reduction <add>, %25, %cst_27 [0] : vector<8x128xf32> to vector<128xf32>
      %30 = vector.shape_cast %29 : vector<128xf32> to vector<1x128xf32>
      %cst_28 = arith.constant dense<0.000000e+00> : vector<128xf32>
      %31 = vector.multi_reduction <add>, %28, %cst_28 [0] : vector<8x128xf32> to vector<128xf32>
      %32 = vector.shape_cast %31 : vector<128xf32> to vector<1x128xf32>
      %cst_29 = arith.constant 1.250000e-01 : f32
      %33 = vector.broadcast %cst_29 : f32 to vector<1x128xf32>
      %34 = arith.mulf %30, %33 : vector<1x128xf32>
      %cst_30 = arith.constant 1.250000e-01 : f32
      %35 = vector.broadcast %cst_30 : f32 to vector<1x128xf32>
      %36 = arith.mulf %32, %35 : vector<1x128xf32>
      %37 = arith.mulf %34, %34 : vector<1x128xf32>
      %38 = arith.subf %36, %37 : vector<1x128xf32>
      %cst_31 = arith.constant 0.000000e+00 : f32
      %39 = vector.broadcast %cst_31 : f32 to vector<1x128xf32>
      %40 = arith.maximumf %38, %39 : vector<1x128xf32>
      %c0_32 = arith.constant 0 : index
      %c0_33 = arith.constant 0 : index
      %41 = vector.load %arg4[%c0_32, %c0_33] : memref<1x128xf32, #tpu.memory_space<vmem>>, vector<1x128xf32>
      %cst_34 = arith.constant 9.99999974E-6 : f32
      %42 = vector.broadcast %cst_34 : f32 to vector<1x128xf32>
      %43 = arith.addf %40, %42 : vector<1x128xf32>
      %44 = math.rsqrt %43 : vector<1x128xf32>
      %45 = arith.mulf %41, %44 : vector<1x128xf32>
      %c0_35 = arith.constant 0 : index
      %c0_36 = arith.constant 0 : index
      %46 = vector.load %arg5[%c0_35, %c0_36] : memref<1x128xf32, #tpu.memory_space<vmem>>, vector<1x128xf32>
      %47 = arith.mulf %45, %34 : vector<1x128xf32>
      %48 = arith.subf %46, %47 : vector<1x128xf32>
      %c0_i32_37 = arith.constant 0 : i32
      %c1_i32 = arith.constant 1 : i32
      %49 = arith.muli %c0_i32_37, %c1_i32 : i32
      %c0_i32_38 = arith.constant 0 : i32
      %50 = arith.addi %c0_i32_38, %49 : i32
      %c2_i32_39 = arith.constant 2 : i32
      %51 = arith.muli %50, %c2_i32_39 : i32
      %52 = arith.index_cast %51 : i32 to index
      %c0_40 = arith.constant 0 : index
      %53 = vector.load %arg6[%52, %c0_40] : memref<2x128xf32, #tpu.memory_space<vmem>>, vector<2x128xf32>
      %54 = vector.broadcast %45 : vector<1x128xf32> to vector<2x128xf32>
      %55 = arith.mulf %53, %54 : vector<2x128xf32>
      %56 = vector.broadcast %48 : vector<1x128xf32> to vector<2x128xf32>
      %57 = arith.addf %55, %56 : vector<2x128xf32>
      %cst_41 = arith.constant 0.000000e+00 : f32
      %58 = vector.broadcast %cst_41 : f32 to vector<2x128xf32>
      %59 = arith.cmpf oge, %57, %58 : vector<2x128xf32>
      %cst_42 = arith.constant 0.00999999977 : f32
      %60 = vector.broadcast %cst_42 : f32 to vector<2x128xf32>
      %61 = arith.mulf %60, %57 : vector<2x128xf32>
      %62 = arith.select %59, %57, %61 : vector<2x128xi1>, vector<2x128xf32>
      %63 = arith.index_cast %51 : i32 to index
      %c0_43 = arith.constant 0 : index
      %64 = vector.load %arg6[%63, %c0_43] : memref<2x128xf32, #tpu.memory_space<vmem>>, vector<2x128xf32>
      tpu.vector_store %arg6[%63, %c0_43], %62 {strides = array<i32>} : memref<2x128xf32, #tpu.memory_space<vmem>>, vector<2x128xf32>,
      %c1_i32_44 = arith.constant 1 : i32
    } else {
    }
    return
  }
  func.func @transform_0(%arg0: i32) -> (i32, i32) {
    %c0_i32 = arith.constant 0 : i32
    %c0_i32_0 = arith.constant 0 : i32
    return %arg0, %c0_i32 : i32, i32
  }
  func.func @transform_1(%arg0: i32) -> (i32, i32) {
    %c0_i32 = arith.constant 0 : i32
    %c0_i32_0 = arith.constant 0 : i32
    %c0_i32_1 = arith.constant 0 : i32
    return %c0_i32, %c0_i32_0 : i32, i32
  }
  func.func @transform_2(%arg0: i32) -> (i32, i32) {
    %c0_i32 = arith.constant 0 : i32
    %c0_i32_0 = arith.constant 0 : i32
    %c0_i32_1 = arith.constant 0 : i32
    return %c0_i32, %c0_i32_0 : i32, i32
  }
  func.func @transform_3(%arg0: i32) -> (i32, i32) {
    %c0_i32 = arith.constant 0 : i32
    %c0_i32_0 = arith.constant 0 : i32
    %c0_i32_1 = arith.constant 0 : i32
    return %c0_i32, %c0_i32_0 : i32, i32
  }
  func.func @transform_4(%arg0: i32) -> (i32, i32) {
    %c0_i32 = arith.constant 0 : i32
    %c0_i32_0 = arith.constant 0 : i32
    %c0_i32_1 = arith.constant 0 : i32
    return %c0_i32, %c0_i32_0 : i32, i32
  }
  func.func @transform_5(%arg0: i32) -> (i32, i32) {
    %c0_i32 = arith.constant 0 : i32
    %c0_i32_0 = arith.constant 0 : i32
    %c0_i32_1 = arith.constant 0 : i32
    return %c0_i32, %c0_i32_0 : i32, i32
  }
}

</mosaic_0001>

<llo_original>
// kernel: dsfe_forward.1
$region0: #{dsfe_forward.1}
  #allocation0 [shape = 'u32[]', space=smem, size = 0x4, offset = 0x4, fixed_abs, tag = 'smem constant byte address 0x4 - core index']
  #allocation1 [shape = 'u32[72,128]{1,0:T(1,128)}', space=vmem, size = 0x9000, scoped, tag = 'internal scratch']
  #allocation2 [shape = 'f32[8,128]{1,0:T(8,128)}', space=vmem, size = 0x1000, scoped, tag = 'scratch operand']
  #allocation3 [shape = 'f32[8,128]{1,0:T(8,128)}', space=vmem, size = 0x1000, scoped, tag = 'scratch operand']
  %s0 = inlined_call_operand.vmem [shape: f32[2,256], index: 0, kind: input, shape index: {}]
  %s1 = inlined_call_operand.vmem [shape: f32[256,128], index: 1, kind: input, shape index: {}]
  %s2 = inlined_call_operand.vmem [shape: f32[128,128], index: 2, kind: input, shape index: {}]
  %s3 = inlined_call_operand.vmem [shape: f32[1,128], index: 3, kind: input, shape index: {}]
  %s4 = inlined_call_operand.vmem [shape: f32[1,128], index: 4, kind: input, shape index: {}]
  %s5 = inlined_call_operand.vmem [shape: f32[2,128], index: 5, kind: output, shape index: {}]
  %s6 = sld [smem:[#allocation0]]
  $region38: #{dsfe_forward.1} parent=0
    _
  %s8 = ssub.s32 1, %s6
  %s9 = scalar_select 0, %s8, %s6
  // Predicated region
  $region2: #{dsfe_forward.1} parent=0 // pred_check
    _
  $region3: #{dsfe_forward.1} parent=0 // pred_check_branch
    %11 = sbr.rel (0) target = $region5
  $region4: #{dsfe_forward.1} parent=0 // pred_region
    _
  $region5: #{dsfe_forward.1} parent=0 // pred_fallthru
    _
  // Predicated region
  $region6: #{dsfe_forward.1} parent=0 // pred_check
    _
  $region7: #{dsfe_forward.1} parent=0 // pred_check_branch
    %13 = sbr.rel (0) target = $region9
  $region8: #{dsfe_forward.1} parent=0 // pred_region
    _
  $region9: #{dsfe_forward.1} parent=0 // pred_fallthru
    _
  // Predicated region
  $region10: #{dsfe_forward.1} parent=0 // pred_check
    _
  $region11: #{dsfe_forward.1} parent=0 // pred_check_branch
    %15 = sbr.rel (0) target = $region13
  $region12: #{dsfe_forward.1} parent=0 // pred_region
    _
  $region13: #{dsfe_forward.1} parent=0 // pred_fallthru
    _
  // Predicated region
  $region14: #{dsfe_forward.1} parent=0 // pred_check
    _
  $region15: #{dsfe_forward.1} parent=0 // pred_check_branch
    %17 = sbr.rel (0) target = $region17
  $region16: #{dsfe_forward.1} parent=0 // pred_region
    _
  $region17: #{dsfe_forward.1} parent=0 // pred_fallthru
    _
  // Predicated region
  $region18: #{dsfe_forward.1} parent=0 // pred_check
    _
  $region19: #{dsfe_forward.1} parent=0 // pred_check_branch
    %19 = sbr.rel (0) target = $region21
  $region20: #{dsfe_forward.1} parent=0 // pred_region
    _
  $region21: #{dsfe_forward.1} parent=0 // pred_fallthru
    _
  %p20 = scmp.eq.s32.totalorder 0, 0
  // Predicated region
  $region22: #{dsfe_forward.1} parent=0 // pred_check
    %p21 = pneg %p20
  $region23: #{dsfe_forward.1} parent=0 // pred_check_branch
    %23 = sbr.rel (%p21) target = $region25
  $region24: #{dsfe_forward.1} parent=0 // pred_region
    %24 = vst [vmem:[#allocation2] sm:$0xff] 0.0
    %25 = vst [vmem:[#allocation3] sm:$0xff] 0.0
  $region25: #{dsfe_forward.1} parent=0 // pred_fallthru
    _
  %v26 = vld [vmem:[%s0] sm:$0xf]
  %v27 = vld [vmem:[%s1] sm:$0xff]
  %v28 = vld [vmem:[%s1 + $0x8] sm:$0xff]
  %v29 = vld [vmem:[%s1 + $0x10] sm:$0xff]
  %v30 = vld [vmem:[%s1 + $0x18] sm:$0xff]
  %v31 = vld [vmem:[%s1 + $0x20] sm:$0xff]
  %v32 = vld [vmem:[%s1 + $0x28] sm:$0xff]
  %v33 = vld [vmem:[%s1 + $0x30] sm:$0xff]
  %v34 = vld [vmem:[%s1 + $0x38] sm:$0xff]
  %v35 = vld [vmem:[%s1 + $0x40] sm:$0xff]
  %v36 = vld [vmem:[%s1 + $0x48] sm:$0xff]
  %v37 = vld [vmem:[%s1 + $0x50] sm:$0xff]
  %v38 = vld [vmem:[%s1 + $0x58] sm:$0xff]
  %v39 = vld [vmem:[%s1 + $0x60] sm:$0xff]
  %v40 = vld [vmem:[%s1 + $0x68] sm:$0xff]
  %v41 = vld [vmem:[%s1 + $0x70] sm:$0xff]
  %v42 = vld [vmem:[%s1 + $0x78] sm:$0xff]
  %v43 = vld [vmem:[%s1 + $0x80] sm:$0xff]
  %v44 = vld [vmem:[%s1 + $0x88] sm:$0xff]
  %v45 = vld [vmem:[%s1 + $0x90] sm:$0xff]
  %v46 = vld [vmem:[%s1 + $0x98] sm:$0xff]
  %v47 = vld [vmem:[%s1 + $0xa0] sm:$0xff]
  %v48 = vld [vmem:[%s1 + $0xa8] sm:$0xff]
  %v49 = vld [vmem:[%s1 + $0xb0] sm:$0xff]
  %v50 = vld [vmem:[%s1 + $0xb8] sm:$0xff]
  %v51 = vld [vmem:[%s1 + $0xc0] sm:$0xff]
  %v52 = vld [vmem:[%s1 + $0xc8] sm:$0xff]
  %v53 = vld [vmem:[%s1 + $0xd0] sm:$0xff]
  %v54 = vld [vmem:[%s1 + $0xd8] sm:$0xff]
  %v55 = vld [vmem:[%s1 + $0xe0] sm:$0xff]
  %v56 = vld [vmem:[%s1 + $0xe8] sm:$0xff]
  %v57 = vld [vmem:[%s1 + $0xf0] sm:$0xff]
  %v58 = vld [vmem:[%s1 + $0xf8] sm:$0xff]
  %60 = vst [vmem:[#allocation1] ss:$4 sm:$0xff] %v26
  %v61 = vld.sshfl [vmem:[#allocation1] sm:$0xff pattern:$0x73625140]
  %v62 = vld.sshfl [vmem:[#allocation1 + $0x8] sm:$0xff pattern:$0x73625140]
  %65 = vmatpush.msra.mxu0 %v42
  %66 = vmatpush.msra.mxu0 %v41
  %67 = vmatpush.msra.mxu0 %v40
  %68 = vmatpush.msra.mxu0 %v39
  %69 = vmatpush.msra.mxu0 %v38
  %70 = vmatpush.msra.mxu0 %v37
  %71 = vmatpush.msra.mxu0 %v36
  %72 = vmatpush.msra.mxu0 %v35
  %73 = vmatpush.msra.mxu0 %v34
  %74 = vmatpush.msra.mxu0 %v33
  %75 = vmatpush.msra.mxu0 %v32
  %76 = vmatpush.msra.mxu0 %v31
  %77 = vmatpush.msra.mxu0 %v30
  %78 = vmatpush.msra.mxu0 %v29
  %79 = vmatpush.msra.mxu0 %v28
  %80 = vmatpush.msra.mxu0 %v27
  %81 = vmatmul.f32.gmra.mxu0 %v61
  %v82 = vpop.f32.mrf.mxu0
  %v83 = vadd.f32 0.0, %v82
  %84 = vdwg.mxu0
  %85 = vmatpush.msra.mxu0 %v58
  %86 = vmatpush.msra.mxu0 %v57
  %87 = vmatpush.msra.mxu0 %v56
  %88 = vmatpush.msra.mxu0 %v55
  %89 = vmatpush.msra.mxu0 %v54
  %90 = vmatpush.msra.mxu0 %v53
  %91 = vmatpush.msra.mxu0 %v52
  %92 = vmatpush.msra.mxu0 %v51
  %93 = vmatpush.msra.mxu0 %v50
  %94 = vmatpush.msra.mxu0 %v49
  %95 = vmatpush.msra.mxu0 %v48
  %96 = vmatpush.msra.mxu0 %v47
  %97 = vmatpush.msra.mxu0 %v46
  %98 = vmatpush.msra.mxu0 %v45
  %99 = vmatpush.msra.mxu0 %v44
  %100 = vmatpush.msra.mxu0 %v43
  %101 = vmatmul.f32.gmra.mxu0 %v62
  %v102 = vpop.f32.mrf.mxu0
  %v103 = vadd.f32 %v83, %v102
  %104 = vdwg.mxu0
  %s105 = smul.u32 0, 2
  %s106 = scalar_lea.vmem %s5, %s105
  %107 = vst [vmem:[%s106] sm:$0x3] %v103
  %v108 = vld [vmem:[#allocation2] sm:$0x1]
  %vm109 = vcmask 1041408
  %v110 = vsel %vm109, %v103, 0.0
  %v111 = vrot.slane %v110, 4
  %v112 = vadd.f32 %v110, %v111
  %v113 = vrot.slane %v112, 2
  %v114 = vadd.f32 %v112, %v113
  %v115 = vrot.slane %v114, 1
  %v116 = vadd.f32 %v114, %v115
  %v117 = vadd.f32 %v108, %v116
  %118 = vst [vmem:[#allocation2] sm:$0x1] %v117
  %v119 = vld [vmem:[#allocation3] sm:$0x1]
  %v120 = vmul.f32 %v103, %v103
  %v121 = vsel %vm109, %v120, 0.0
  %v122 = vrot.slane %v121, 4
  %v123 = vadd.f32 %v121, %v122
  %v124 = vrot.slane %v123, 2
  %v125 = vadd.f32 %v123, %v124
  %v126 = vrot.slane %v125, 1
  %v127 = vadd.f32 %v125, %v126
  %v128 = vadd.f32 %v119, %v127
  %129 = vst [vmem:[#allocation3] sm:$0x1] %v128
  // Predicated region
  $region26: #{dsfe_forward.1} parent=0 // pred_check
    %p130 = pneg %p20
  $region27: #{dsfe_forward.1} parent=0 // pred_check_branch
    %132 = sbr.rel (%p130) target = $region29
  $region28: #{dsfe_forward.1} parent=0 // pred_region
    %v133 = vld [vmem:[#allocation2] sm:$0xff]
    %v134 = vld [vmem:[%s2] sm:$0xff]
    %v135 = vld [vmem:[%s2 + $0x8] sm:$0xff]
    %v136 = vld [vmem:[%s2 + $0x10] sm:$0xff]
    %v137 = vld [vmem:[%s2 + $0x18] sm:$0xff]
    %v138 = vld [vmem:[%s2 + $0x20] sm:$0xff]
    %v139 = vld [vmem:[%s2 + $0x28] sm:$0xff]
    %v140 = vld [vmem:[%s2 + $0x30] sm:$0xff]
    %v141 = vld [vmem:[%s2 + $0x38] sm:$0xff]
    %v142 = vld [vmem:[%s2 + $0x40] sm:$0xff]
    %v143 = vld [vmem:[%s2 + $0x48] sm:$0xff]
    %v144 = vld [vmem:[%s2 + $0x50] sm:$0xff]
    %v145 = vld [vmem:[%s2 + $0x58] sm:$0xff]
    %v146 = vld [vmem:[%s2 + $0x60] sm:$0xff]
    %v147 = vld [vmem:[%s2 + $0x68] sm:$0xff]
    %v148 = vld [vmem:[%s2 + $0x70] sm:$0xff]
    %v149 = vld [vmem:[%s2 + $0x78] sm:$0xff]
    %150 = vmatpush.msra.mxu0 %v149
    %151 = vmatpush.msra.mxu0 %v148
    %152 = vmatpush.msra.mxu0 %v147
    %153 = vmatpush.msra.mxu0 %v146
    %154 = vmatpush.msra.mxu0 %v145
    %155 = vmatpush.msra.mxu0 %v144
    %156 = vmatpush.msra.mxu0 %v143
    %157 = vmatpush.msra.mxu0 %v142
    %158 = vmatpush.msra.mxu0 %v141
    %159 = vmatpush.msra.mxu0 %v140
    %160 = vmatpush.msra.mxu0 %v139
    %161 = vmatpush.msra.mxu0 %v138
    %162 = vmatpush.msra.mxu0 %v137
    %163 = vmatpush.msra.mxu0 %v136
    %164 = vmatpush.msra.mxu0 %v135
    %165 = vmatpush.msra.mxu0 %v134
    %166 = vmatmul.f32.gmra.mxu0 %v133
    %v167 = vpop.f32.mrf.mxu0
    %v168 = vadd.f32 0.0, %v167
    %169 = vdwg.mxu0
    %v170 = vld [vmem:[#allocation3] sm:$0xff]
    %171 = vmatpush.msra.mxu0 %v149
    %172 = vmatpush.msra.mxu0 %v148
    %173 = vmatpush.msra.mxu0 %v147
    %174 = vmatpush.msra.mxu0 %v146
    %175 = vmatpush.msra.mxu0 %v145
    %176 = vmatpush.msra.mxu0 %v144
    %177 = vmatpush.msra.mxu0 %v143
    %178 = vmatpush.msra.mxu0 %v142
    %179 = vmatpush.msra.mxu0 %v141
    %180 = vmatpush.msra.mxu0 %v140
    %181 = vmatpush.msra.mxu0 %v139
    %182 = vmatpush.msra.mxu0 %v138
    %183 = vmatpush.msra.mxu0 %v137
    %184 = vmatpush.msra.mxu0 %v136
    %185 = vmatpush.msra.mxu0 %v135
    %186 = vmatpush.msra.mxu0 %v134
    %187 = vmatmul.f32.gmra.mxu0 %v170
    %v188 = vpop.f32.mrf.mxu0
    %v189 = vadd.f32 0.0, %v188
    %190 = vdwg.mxu0
    %v191 = vrot.slane %v168, 4
    %v192 = vadd.f32 %v168, %v191
    %v193 = vrot.slane %v192, 2
    %v194 = vadd.f32 %v192, %v193
    %v195 = vrot.slane %v194, 1
    %v196 = vadd.f32 %v194, %v195
    %v197 = vrot.slane %v189, 4
    %v198 = vadd.f32 %v189, %v197
    %v199 = vrot.slane %v198, 2
    %v200 = vadd.f32 %v198, %v199
    %v201 = vrot.slane %v200, 1
    %v202 = vadd.f32 %v200, %v201
    %v203 = vmul.f32 %v196, 0.125
    %v204 = vmul.f32 %v202, 0.125
    %v205 = vmul.f32 %v203, %v203
    %v206 = vsub.f32 %v204, %v205
    %v207 = vmax.f32 %v206, 0.0
    %v208 = vld [vmem:[%s3] sm:$0x1]
    %v209 = vadd.f32 %v207, 1e-05
    %v210 = vrsqrt.pop %v209
    %v211 = vmul.f32 %v210, %v209
    %v212 = vmul.f32 %v211, %v210
    %v213 = vmul.f32 0.5, %v212
    %v214 = vsub.f32 1.5, %v213
    %v215 = vmul.f32 %v210, %v214
    %vm216 = vweird.f32 %v209
    %vm217 = vweird.f32 %v210
    %vm218 = vmor %vm216, %vm217
    %v219 = vsel %vm218, %v210, %v215
    %v220 = vmul.f32 %v208, %v219
    %v221 = vld [vmem:[%s4] sm:$0x1]
    %v222 = vmul.f32 %v220, %v203
    %v223 = vsub.f32 %v221, %v222
    %v224 = vld [vmem:[%s5] sm:$0x3]
    %v226 = vperm.slane %v220, 0
    %v228 = vmul.f32 %v224, %v226
    %v230 = vperm.slane %v223, 0
    %v232 = vadd.f32 %v228, %v230
    %vm233 = vcmp.ge.f32.partialorder %v232, 0.0
    %v234 = vmul.f32 %v232, 0.01
    %v235 = vsel %vm233, %v232, %v234
    %236 = vst [vmem:[%s5] sm:$0x3] %v235
  $region29: #{dsfe_forward.1} parent=0 // pred_fallthru
    _
  // Predicated region
  $region30: #{dsfe_forward.1} parent=0 // pred_check
    _
  $region31: #{dsfe_forward.1} parent=0 // pred_check_branch
    %238 = sbr.rel (0) target = $region33
  $region32: #{dsfe_forward.1} parent=0 // pred_region
    _
  $region33: #{dsfe_forward.1} parent=0 // pred_fallthru
    _
  // Predicated region
  $region34: #{dsfe_forward.1} parent=0 // pred_check
    _
  $region35: #{dsfe_forward.1} parent=0 // pred_check_branch
    %240 = sbr.rel (0) target = $region37
  $region36: #{dsfe_forward.1} parent=0 // pred_region
    _
  $region37: #{dsfe_forward.1} parent=0 // pred_fallthru
    _

</llo_original>
